<compile_context>
chip_gen: v6e
topology: v6e:2x2x1
jax: 0.10.0
libtpu: 0.0.40
codegen_flags: <defaults>
</compile_context>

<pallas_src>
import jax
import jax.numpy as jnp
from jax.experimental import pallas as pl
from jax.experimental.pallas import tpu as pltpu

H1, H2, C = 10, 8, 3        # layer widths from the PyTorch module
C_PAD = 8                   # class rows padded to one sublane group
LANE = 128                  # TPU lane width; batch tile is a multiple of this
SUB = 8                     # sublane granularity
NEG_INF = -1e30
DEFAULT_TILE_B = 4096       # batch lanes per grid step


def _round_up(x, m):
    return (x + m - 1) // m * m


def _cdiv(a, b):
    return (a + b - 1) // b


def _param_layout(feat):
    """Row offsets of each packed (transposed) parameter in the (32,128) slab."""
    assert feat + 1 <= LANE and H1 + 1 <= LANE and H2 + 1 <= LANE
    r1 = 0
    r2 = _round_up(H1, SUB)          # 16
    r3 = r2 + _round_up(H2, SUB)     # 24
    rows = r3 + C_PAD                # 32
    return dict(r1=r1, r2=r2, r3=r3, rows=rows)


def pack_params(params, feat):
    """Pack w1,b1,w2,b2,w3,b3 (class-major / transposed) into one f32 slab.

    Layer i occupies rows [ri : ri + out_i): transposed weight in lanes
    [0:in_i), bias in lane in_i.  Layer 3's class dim is padded 3 -> 8 rows
    with zero weights and -1e30 bias so padded logits exp() to exactly 0 and
    the stored (8, tile) block needs no masking.  Call ONCE, not per forward.
    """
    lay = _param_layout(feat)
    packed = jnp.zeros((lay["rows"], LANE), jnp.float32)
    packed = packed.at[lay["r1"]:lay["r1"] + H1, :feat].set(params["w1"].T)
    packed = packed.at[lay["r1"]:lay["r1"] + H1, feat].set(
        params["b1"].reshape(H1))
    packed = packed.at[lay["r2"]:lay["r2"] + H2, :H1].set(params["w2"].T)
    packed = packed.at[lay["r2"]:lay["r2"] + H2, H1].set(
        params["b2"].reshape(H2))
    packed = packed.at[lay["r3"]:lay["r3"] + C, :H2].set(params["w3"].T)
    b3_col = jnp.full((C_PAD,), NEG_INF, jnp.float32).at[:C].set(
        params["b3"].reshape(C))
    packed = packed.at[lay["r3"]:lay["r3"] + C_PAD, H2].set(b3_col)
    return packed


def _make_kernel(feat, lay):
    r1, r2, r3 = lay["r1"], lay["r2"], lay["r3"]

    def kernel(xT_ref, p_ref, out_ref):
        # x tile: (feat, tb) bf16, batch on lanes.  Fed straight to the dot
        # (promotion touches only `feat` sublanes); MXU accumulates in f32.
        x = xT_ref[...]

        w1 = p_ref[r1:r1 + H1, 0:feat]            # (H1, feat)
        b1 = p_ref[r1:r1 + H1, feat:feat + 1]     # (H1, 1) -> lane broadcast
        h1 = jnp.maximum(
            jnp.dot(w1, x, preferred_element_type=jnp.float32) + b1, 0.0)

        w2 = p_ref[r2:r2 + H2, 0:H1]              # (H2, H1)
        b2 = p_ref[r2:r2 + H2, H1:H1 + 1]         # (H2, 1)
        h2 = jnp.maximum(
            jnp.dot(w2, h1, preferred_element_type=jnp.float32) + b2, 0.0)

        w3 = p_ref[r3:r3 + C_PAD, 0:H2]           # (8, H2); rows C..7 are 0
        b3 = p_ref[r3:r3 + C_PAD, H2:H2 + 1]      # (8, 1);  rows C..7 = -1e30
        logits = jnp.dot(w3, h2, preferred_element_type=jnp.float32) + b3

        # Softmax over the 3 real classes (sublanes 0..2): slice compares on
        # the VPU, no cross-lane XLU reduction.  Padded rows exp() to 0.
        l0, l1, l2 = logits[0:1, :], logits[1:2, :], logits[2:3, :]
        m = jnp.maximum(jnp.maximum(l0, l1), l2)
        e = jnp.exp(logits - m)                   # (8, tb); rows 3..7 -> 0.0
        denom = e[0:1, :] + e[1:2, :] + e[2:3, :]
        # Exact reciprocal (approx=True is emulated as a bf16 reciprocal
        # outside Mosaic and breaks 1e-3 accuracy / exact normalization).
        out_ref[...] = (e * pl.reciprocal(denom)).astype(out_ref.dtype)

    return kernel


def _pick_tile_b(batch, tile_b):
    # Lane-aligned tile; aim for >= 2 grid steps when possible so the
    # "parallel" batch axis can land on both of v7x's TensorCores, and keep
    # padding waste bounded by one tile.
    tb = min(int(tile_b), _round_up(max(_cdiv(batch, 2), 1), LANE))
    return max(LANE, tb)


def penguin_model_forward(x, packed, *, tile_b=DEFAULT_TILE_B):
    """x: (B, F) float; packed: pack_params() slab. Returns (B, 3) f32 probs."""
    B, feat = x.shape
    lay = _param_layout(feat)
    assert packed.shape == (lay["rows"], LANE)

    tb = _pick_tile_b(B, tile_b)
    b_pad = _round_up(B, tb)

    # Class-major transport: (feat, b_pad) bf16, batch on lanes.  Padded batch
    # columns are zeros and get sliced off below.
    xT = x.astype(jnp.bfloat16).T
    if b_pad != B:
        xT = jnp.pad(xT, ((0, 0), (0, b_pad - B)))

    out = pl.pallas_call(
        _make_kernel(feat, lay),
        out_shape=jax.ShapeDtypeStruct((C_PAD, b_pad), jnp.float32),
        grid=(b_pad // tb,),
        in_specs=[
            # x: tiled along the batch lanes -> double-buffered by Pallas.
            pl.BlockSpec((feat, tb), lambda i: (0, i)),
            # packed params: same block every step -> stays VMEM-resident.
            pl.BlockSpec((lay["rows"], LANE), lambda i: (0, 0)),
        ],
        # Lane-dense (8, tb) f32 block: 32 B/row writeback vs 512 B/row for
        # the old 128-lane-padded slab.
        out_specs=pl.BlockSpec((C_PAD, tb), lambda i: (0, i)),
        compiler_params=pltpu.CompilerParams(
            dimension_semantics=("parallel",)),
    )(xT, packed)

    return out[:C, :B].T


def init_params(key, input_shape):
    """Init mirroring nn.Linear shapes; weights stored as (in, out)."""
    sizes = [(input_shape, H1), (H1, H2), (H2, C)]
    params = {}
    for i, (fan_in, fan_out) in enumerate(sizes, start=1):
        key, kw, kb = jax.random.split(key, 3)
        bound = 1.0 / jnp.sqrt(jnp.float32(fan_in))
        params[f"w{i}"] = jax.random.uniform(
            kw, (fan_in, fan_out), jnp.float32, minval=-bound, maxval=bound)
        params[f"b{i}"] = jax.random.uniform(
            kb, (1, fan_out), jnp.float32, minval=-bound, maxval=bound)
    return params


def reference_forward(x, params):
    xf = x.astype(jnp.float32)
    h1 = jnp.maximum(xf @ params["w1"] + params["b1"], 0.0)
    h2 = jnp.maximum(h1 @ params["w2"] + params["b2"], 0.0)
    logits = h2 @ params["w3"] + params["b3"]
    return jax.nn.softmax(logits, axis=1)


if __name__ == "__main__":
    key = jax.random.PRNGKey(0)
    key, kx = jax.random.split(key)

    batch = 300          # exercises 2 grid steps (tb=256) + batch padding
    input_shape = 4      # penguin features (bill len/depth, flipper, mass)
    x = jax.random.normal(kx, (batch, input_shape), dtype=jnp.float32)
    params = init_params(key, input_shape)

    packed = pack_params(params, input_shape)   # hoisted out of the fwd path
    forward = jax.jit(penguin_model_forward)

    out = jax.block_until_ready(forward(x, packed))

    # Reference sees the same bf16-rounded input the kernel transports
    # (documented input quantization; all downstream math is f32).
    ref = reference_forward(x.astype(jnp.bfloat16), params)

    assert out.shape == (batch, C)
    assert bool(jnp.allclose(out, ref, atol=1e-3, rtol=1e-3))
    # Exact divide -> rows sum to 1 up to f32 rounding.
    assert bool(jnp.allclose(jnp.sum(out, axis=1), jnp.ones((batch,)),
                             atol=1e-4))
    # Argmax agreement on rows that are not near-ties (avoids tie flakes).
    top2 = jnp.sort(ref, axis=1)
    decided = (top2[:, -1] - top2[:, -2]) > 1e-3
    same = jnp.argmax(out, axis=1) == jnp.argmax(ref, axis=1)
    assert bool(jnp.all(jnp.where(decided, same, True)))

    print("KERNEL_OK")
</pallas_src>

<mosaic_0001>
module attributes {stable_mosaic.version = 11 : i64} {
  func.func @kernel(%arg0: i32, %arg1: memref<4x256xbf16, #tpu.memory_space<vmem>>, %arg2: memref<32x128xf32, #tpu.memory_space<vmem>>, %arg3: memref<8x256xf32, #tpu.memory_space<vmem>>) attributes {dimension_semantics = [#tpu.dimension_semantics<parallel>], iteration_bounds = array<i64: 2>, scalar_prefetch = 0 : i64, scratch_operands = 0 : i64, tpu.core_type = #tpu.core_type<tc>, window_params = [{transform_indices = @transform_0, window_bounds = array<i64: 4, 256>}, {pipeline_mode = #tpu.pipeline_mode<synchronous>, transform_indices = @transform_1, window_bounds = array<i64: 32, 128>}, {transform_indices = @transform_2, window_bounds = array<i64: 8, 256>}]} {
    %c0 = arith.constant 0 : index
    %c0_0 = arith.constant 0 : index
    %0 = vector.load %arg1[%c0, %c0_0] : memref<4x256xbf16, #tpu.memory_space<vmem>>, vector<4x256xbf16>
    %c0_1 = arith.constant 0 : index
    %c0_2 = arith.constant 0 : index
    %1 = vector.load %arg2[%c0_1, %c0_2] : memref<32x128xf32, #tpu.memory_space<vmem>>, vector<10x4xf32>
    %c0_3 = arith.constant 0 : index
    %c4 = arith.constant 4 : index
    %2 = vector.load %arg2[%c0_3, %c4] : memref<32x128xf32, #tpu.memory_space<vmem>>, vector<10x1xf32>
    %cst = arith.constant dense<0.000000e+00> : vector<10x256xf32>
    %3 = tpu.matmul %1, %0, %cst {dimension_numbers = #tpu.dot_dimension_numbers<[1], [0], [0], [1], [0, 0, 1, 1], [], []>} : vector<10x4xf32>, vector<4x256xbf16>, vector<10x256xf32> -> vector<10x256xf32>
    %4 = vector.broadcast %2 : vector<10x1xf32> to vector<10x256xf32>
    %5 = arith.addf %3, %4 : vector<10x256xf32>
    %cst_4 = arith.constant 0.000000e+00 : f32
    %6 = vector.broadcast %cst_4 : f32 to vector<10x256xf32>
    %7 = arith.maximumf %5, %6 : vector<10x256xf32>
    %c16 = arith.constant 16 : index
    %c0_5 = arith.constant 0 : index
    %8 = vector.load %arg2[%c16, %c0_5] : memref<32x128xf32, #tpu.memory_space<vmem>>, vector<8x10xf32>
    %c16_6 = arith.constant 16 : index
    %c10 = arith.constant 10 : index
    %9 = vector.load %arg2[%c16_6, %c10] : memref<32x128xf32, #tpu.memory_space<vmem>>, vector<8x1xf32>
    %cst_7 = arith.constant dense<0.000000e+00> : vector<8x256xf32>
    %10 = tpu.matmul %8, %7, %cst_7 {dimension_numbers = #tpu.dot_dimension_numbers<[1], [0], [0], [1], [0, 0, 1, 1], [], []>} : vector<8x10xf32>, vector<10x256xf32>, vector<8x256xf32> -> vector<8x256xf32>
    %11 = vector.broadcast %9 : vector<8x1xf32> to vector<8x256xf32>
    %12 = arith.addf %10, %11 : vector<8x256xf32>
    %cst_8 = arith.constant 0.000000e+00 : f32
    %13 = vector.broadcast %cst_8 : f32 to vector<8x256xf32>
    %14 = arith.maximumf %12, %13 : vector<8x256xf32>
    %c24 = arith.constant 24 : index
    %c0_9 = arith.constant 0 : index
    %15 = vector.load %arg2[%c24, %c0_9] : memref<32x128xf32, #tpu.memory_space<vmem>>, vector<8x8xf32>
    %c24_10 = arith.constant 24 : index
    %c8 = arith.constant 8 : index
    %16 = vector.load %arg2[%c24_10, %c8] : memref<32x128xf32, #tpu.memory_space<vmem>>, vector<8x1xf32>
    %cst_11 = arith.constant dense<0.000000e+00> : vector<8x256xf32>
    %17 = tpu.matmul %15, %14, %cst_11 {dimension_numbers = #tpu.dot_dimension_numbers<[1], [0], [0], [1], [0, 0, 1, 1], [], []>} : vector<8x8xf32>, vector<8x256xf32>, vector<8x256xf32> -> vector<8x256xf32>
    %18 = vector.broadcast %16 : vector<8x1xf32> to vector<8x256xf32>
    %19 = arith.addf %17, %18 : vector<8x256xf32>
    %20 = vector.extract_strided_slice %19 {offsets = [0, 0], sizes = [1, 256], strides = [1, 1]} : vector<8x256xf32> to vector<1x256xf32>
    %21 = vector.extract_strided_slice %19 {offsets = [1, 0], sizes = [1, 256], strides = [1, 1]} : vector<8x256xf32> to vector<1x256xf32>
    %22 = vector.extract_strided_slice %19 {offsets = [2, 0], sizes = [1, 256], strides = [1, 1]} : vector<8x256xf32> to vector<1x256xf32>
    %23 = arith.maximumf %20, %21 : vector<1x256xf32>
    %24 = arith.maximumf %23, %22 : vector<1x256xf32>
    %25 = vector.broadcast %24 : vector<1x256xf32> to vector<8x256xf32>
    %26 = arith.subf %19, %25 : vector<8x256xf32>
    %27 = math.exp %26 : vector<8x256xf32>
    %28 = vector.extract_strided_slice %27 {offsets = [0, 0], sizes = [1, 256], strides = [1, 1]} : vector<8x256xf32> to vector<1x256xf32>
    %29 = vector.extract_strided_slice %27 {offsets = [1, 0], sizes = [1, 256], strides = [1, 1]} : vector<8x256xf32> to vector<1x256xf32>
    %30 = arith.addf %28, %29 : vector<1x256xf32>
    %31 = vector.extract_strided_slice %27 {offsets = [2, 0], sizes = [1, 256], strides = [1, 1]} : vector<8x256xf32> to vector<1x256xf32>
    %32 = arith.addf %30, %31 : vector<1x256xf32>
    %33 = tpu.reciprocal %32 : vector<1x256xf32> -> vector<1x256xf32>
    %34 = vector.broadcast %33 : vector<1x256xf32> to vector<8x256xf32>
    %35 = arith.mulf %27, %34 : vector<8x256xf32>
    %c0_12 = arith.constant 0 : index
    %c0_13 = arith.constant 0 : index
    %36 = vector.load %arg3[%c0_12, %c0_13] : memref<8x256xf32, #tpu.memory_space<vmem>>, vector<8x256xf32>
    tpu.vector_store %arg3[%c0_12, %c0_13], %35 {strides = array<i32>} : memref<8x256xf32, #tpu.memory_space<vmem>>, vector<8x256xf32>,
    return
  }
  func.func @transform_0(%arg0: i32) -> (i32, i32) {
    %c0_i32 = arith.constant 0 : i32
    %c0_i32_0 = arith.constant 0 : i32
    return %c0_i32, %arg0 : i32, i32
  }
  func.func @transform_1(%arg0: i32) -> (i32, i32) {
    %c0_i32 = arith.constant 0 : i32
    %c0_i32_0 = arith.constant 0 : i32
    %c0_i32_1 = arith.constant 0 : i32
    return %c0_i32, %c0_i32_0 : i32, i32
  }
  func.func @transform_2(%arg0: i32) -> (i32, i32) {
    %c0_i32 = arith.constant 0 : i32
    %c0_i32_0 = arith.constant 0 : i32
    return %c0_i32, %arg0 : i32, i32
  }
}

</mosaic_0001>

<llo_original>
// kernel: penguin_model_forward.1
$region0: #{penguin_model_forward.1}
  #allocation0 [shape = 'u32[]', space=smem, size = 0x4, offset = 0x4, fixed_abs, tag = 'smem constant byte address 0x4 - core index']
  #allocation1 [shape = 'u32[144,128]{1,0:T(1,128)}', space=vmem, size = 0x12000, scoped, tag = 'internal scratch']
  %s0 = inlined_call_operand.vmem [shape: bf16[4,512], index: 0, kind: input, shape index: {}]
  %s1 = inlined_call_operand.vmem [shape: f32[32,128], index: 1, kind: input, shape index: {}]
  %s2 = inlined_call_operand.vmem [shape: f32[8,512], index: 2, kind: output, shape index: {}]
  %s3 = sld [smem:[#allocation0]]
  $region41: #{penguin_model_forward.1} parent=0
    _
  %s5 = ssub.s32 1, %s3
  %s6 = scalar_select 0, %s5, %s3
  loop: start=0, step=1, limit=4
  $region2: #{penguin_model_forward.1} parent=0 // loop_pre_header
    _
  $region3: #{penguin_model_forward.1} parent=0 // loop_header
    %s8 = sphi 0, %s12
    %p9 = scmp.ge.s32.totalorder %s8, 4
    %s18 = sphi 0, %s20
    %s21 = sphi 0, %s18
    %s22 = sphi 0, %s21
    %s38 = sphi 0, %s22
    %s42 = sphi 0, %s42
    %s44 = sphi 0, %s42
    %s45 = sphi 0, %s44
    %s59 = sphi 0, %s45
    %s65 = sphi 0, %s67
    %s68 = sphi 0, %s65
    %s69 = sphi 0, %s68
    %s85 = sphi 0, %s69
  $region4: #{penguin_model_forward.1} parent=0 // loop_header_branch
    %11 = sbr.rel (%p9) target = $region8
  $region5: #{penguin_model_forward.1} parent=0 // loop_body
    %s13 = ssub.s32 %s8, 1
    %s14 = ssub.s32 %s8, 2
    %s15 = sadd.s32 %s8, 1
    %s16 = ssub.s32 %s8, %s15
    %p17 = scmp.eq.s32.totalorder %s16, 0
    %s19 = sadd.s32 %s18, 1
    %s20 = scalar_select %p17, %s18, %s19
    %p23 = pneg %p17
    %p24 = scmp.eq.s32.totalorder %s8, 1
    %p25 = por %p23, %p24
    %p26 = scmp.ne.s32.totalorder %s18, %s21
    %p27 = scmp.eq.s32.totalorder %s8, 0
    %p28 = por %p26, %p27
    %p29 = scmp.ne.s32.totalorder %s18, %s21
    %p30 = scmp.eq.s32.totalorder %s13, 1
    %p31 = por %p29, %p30
    %p32 = scmp.ne.s32.totalorder %s21, %s22
    %p33 = scmp.eq.s32.totalorder %s13, 0
    %p34 = por %p32, %p33
    %p35 = scmp.ne.s32.totalorder %s21, %s22
    %p36 = scmp.eq.s32.totalorder %s14, 1
    %p37 = por %p35, %p36
    %p39 = scmp.ne.s32.totalorder %s22, %s38
    %p40 = scmp.eq.s32.totalorder %s14, 0
    %p41 = por %p39, %p40
    %s43 = sadd.s32 %s42, 1
    %p46 = scmp.eq.s32.totalorder %s8, 1
    %p47 = scmp.ne.s32.totalorder %s42, %s44
    %p48 = scmp.eq.s32.totalorder %s8, 0
    %p49 = por %p47, %p48
    %p50 = scmp.ne.s32.totalorder %s42, %s44
    %p51 = scmp.eq.s32.totalorder %s13, 1
    %p52 = por %p50, %p51
    %p53 = scmp.ne.s32.totalorder %s44, %s45
    %p54 = scmp.eq.s32.totalorder %s13, 0
    %p55 = por %p53, %p54
    %p56 = scmp.ne.s32.totalorder %s44, %s45
    %p57 = scmp.eq.s32.totalorder %s14, 1
    %p58 = por %p56, %p57
    %p60 = scmp.ne.s32.totalorder %s45, %s59
    %p61 = scmp.eq.s32.totalorder %s14, 0
    %p62 = por %p60, %p61
    %s63 = ssub.s32 %s8, %s15
    %p64 = scmp.eq.s32.totalorder %s63, 0
    %s66 = sadd.s32 %s65, 1
    %s67 = scalar_select %p64, %s65, %s66
    %p70 = pneg %p64
    %p71 = scmp.eq.s32.totalorder %s8, 1
    %p72 = por %p70, %p71
    %p73 = scmp.ne.s32.totalorder %s65, %s68
    %p74 = scmp.eq.s32.totalorder %s8, 0
    %p75 = por %p73, %p74
    %p76 = scmp.ne.s32.totalorder %s65, %s68
    %p77 = scmp.eq.s32.totalorder %s13, 1
    %p78 = por %p76, %p77
    %p79 = scmp.ne.s32.totalorder %s68, %s69
    %p80 = scmp.eq.s32.totalorder %s13, 0
    %p81 = por %p79, %p80
    %p82 = scmp.ne.s32.totalorder %s68, %s69
    %p83 = scmp.eq.s32.totalorder %s14, 1
    %p84 = por %p82, %p83
    %p86 = scmp.ne.s32.totalorder %s69, %s85
    %p87 = scmp.eq.s32.totalorder %s14, 0
    %p88 = por %p86, %p87
    %p89 = scmp.le.s32.totalorder 1, %s8
    %p90 = scmp.lt.s32.totalorder %s8, 3
    %p91 = pnand %p89, %p90
    %p92 = pneg %p91
    // Predicated region
    $region9: #{penguin_model_forward.1} parent=5 // pred_check
      _
    $region10: #{penguin_model_forward.1} parent=5 // pred_check_branch
      %94 = sbr.rel (%p91) target = $region12
    $region11: #{penguin_model_forward.1} parent=5 // pred_region
      %s95 = ssub.s32 %s8, 1
      // Predicated region
      $region13: #{penguin_model_forward.1} parent=11 // pred_check
        %p96 = pneg %p55
      $region14: #{penguin_model_forward.1} parent=11 // pred_check_branch
        %98 = sbr.rel (%p96) target = $region16
      $region15: #{penguin_model_forward.1} parent=11 // pred_region
        _
      $region16: #{penguin_model_forward.1} parent=11 // pred_fallthru
        _
    $region12: #{penguin_model_forward.1} parent=5 // pred_fallthru
      _
    %p99 = scmp.lt.s32.totalorder %s8, 2
    // Predicated region
    $region17: #{penguin_model_forward.1} parent=5 // pred_check
      %p100 = pneg %p99
    $region18: #{penguin_model_forward.1} parent=5 // pred_check_branch
      %102 = sbr.rel (%p100) target = $region20
    $region19: #{penguin_model_forward.1} parent=5 // pred_region
      // Predicated region
      $region21: #{penguin_model_forward.1} parent=19 // pred_check
        %p103 = pneg %p28
      $region22: #{penguin_model_forward.1} parent=19 // pred_check_branch
        %105 = sbr.rel (%p103) target = $region24
      $region23: #{penguin_model_forward.1} parent=19 // pred_region
        %s106 = smul.u32 2, %s8
        %p107 = scmp.lt.s32.totalorder %s106, 3
        %s108 = scalar_select %p107, %s106, 3
        %s109 = smul.addr %s108, 2
        %s110 = scalar_lea.vmem %s0, %s109
        %s111 = smul.u32 2, %s8
      $region24: #{penguin_model_forward.1} parent=19 // pred_fallthru
        _
    $region20: #{penguin_model_forward.1} parent=5 // pred_fallthru
      _
    %p112 = scmp.le.s32.totalorder 1, %s8
    %p113 = scmp.lt.s32.totalorder %s8, 3
    %p114 = pnand %p112, %p113
    %p115 = pneg %p114
    // Predicated region
    $region25: #{penguin_model_forward.1} parent=5 // pred_check
      _
    $region26: #{penguin_model_forward.1} parent=5 // pred_check_branch
      %117 = sbr.rel (%p114) target = $region28
    $region27: #{penguin_model_forward.1} parent=5 // pred_region
      %s118 = ssub.s32 %s8, 1
      %s119 = smul.u32 2, %s13
      %p120 = scmp.lt.s32.totalorder %s119, 3
      %s121 = scalar_select %p120, %s119, 3
      %s122 = smul.addr %s121, 2
      %s123 = scalar_lea.vmem %s0, %s122
      %p124 = pneg %p34
      %p125 = pneg %p31
      %p126 = pneg %p55
      %p127 = pneg %p52
      %p128 = pneg %p81
      %p129 = pneg %p78
      %s130 = smul.u32 2, %s13
      %p131 = scmp.lt.s32.totalorder %s130, 3
      %s132 = scalar_select %p131, %s130, 3
      %s133 = smul.addr %s132, 8
      %s134 = scalar_lea.vmem %s2, %s133
      %s135 = smul.u32 2, %s13
      %p136 = scmp.lt.s32.totalorder %s135, 3
      %s137 = scalar_select %p136, %s135, 3
      %s138 = smul.addr %s137, 2
      %s139 = scalar_lea.vmem %s0, %s138
      %s140 = smul.u32 2, %s13
      %s141 = smul.u32 2, %s13
      %p142 = scmp.lt.s32.totalorder %s141, 3
      %s143 = scalar_select %p142, %s141, 3
      %s144 = smul.addr %s143, 8
      %s145 = scalar_lea.vmem %s2, %s144
      %s146 = smul.u32 2, %s13
      %v148 = vld [vmem:[%s139] sm:$0xf]
      %v149 = vld [vmem:[%s1] sm:$0xff]
      %v150 = vld [vmem:[%s1 + $0x8] sm:$0x3]
      %152 = vset.pattern.permute.xlu0 4
      %153 = vperm.xlu0 %152, %v149
      %v154 = vpop.permute.xlu0 %153
      %157 = vset.pattern.permute.xlu0 4
      %158 = vperm.xlu0 %157, %v150
      %v159 = vpop.permute.xlu0 %158
      %v163 = vunpack.c.l.s4 1983009808
      %v164 = vunpack.c.0.s8 %v163
      %v165 = vlaneseq
      %v166 = vshrl.u32 %v165, 7
      %v167 = vsub.s32 %v164, %v166
      %v168 = vrot.slane %v148, %v167
      %v169 = vcombine.high %v168, %v168
      %vm170 = vcmask 31744
      %v171 = vsel %vm170, %v149, 0
      %v173 = vsel %vm170, %v150, 0
      %vm175 = vcmask 1041408
      %v177 = vsel %vm175, %v168, 0
      %v180 = vsel %vm175, %v169, 0
      %182 = vmatprep.subr.bf16.mxu0 0
      %183 = vmatpush1.bf16.msra.mxu0 0
      %184 = vmatprep.subr.bf16.mxu0 0
      %185 = vmatpush1.bf16.msra.mxu0 0
      %186 = vmatprep.subr.bf16.mxu0 0
      %187 = vmatpush1.bf16.msra.mxu0 0
      %188 = vmatprep.subr.bf16.mxu0 0
      %189 = vmatpush1.bf16.msra.mxu0 0
      %190 = vmatprep.subr.bf16.mxu0 0
      %191 = vmatpush1.bf16.msra.mxu0 0
      %192 = vmatprep.subr.bf16.mxu0 0
      %193 = vmatpush1.bf16.msra.mxu0 0
      %194 = vmatprep.subr.bf16.mxu0 0
      %195 = vmatpush1.bf16.msra.mxu0 0
      %196 = vmatprep.subr.bf16.mxu0 %v180
      %197 = vmatpush1.bf16.msra.mxu0 %v177
      %198 = vmatprep.subr.bf16.mxu0 0
      %199 = vmatpush2.bf16.msra.mxu0 0
      %200 = vmatprep.subr.bf16.mxu0 0
      %201 = vmatpush2.bf16.msra.mxu0 0
      %202 = vmatprep.subr.bf16.mxu0 0
      %203 = vmatpush2.bf16.msra.mxu0 0
      %204 = vmatprep.subr.bf16.mxu0 0
      %205 = vmatpush2.bf16.msra.mxu0 0
      %206 = vmatprep.subr.bf16.mxu0 0
      %207 = vmatpush2.bf16.msra.mxu0 0
      %208 = vmatprep.subr.bf16.mxu0 0
      %209 = vmatpush2.bf16.msra.mxu0 0
      %210 = vmatprep.subr.bf16.mxu0 0
      %211 = vmatpush2.bf16.msra.mxu0 0
      %212 = vmatprep.subr.bf16.mxu0 0
      %213 = vmatpush2.bf16.msra.mxu0 0
      %214 = vmatprep.mubr.f32.mxu0 0.0
      %215 = vmatmul.mubr.f32.gmra.mxu0 %v171
      %v216 = vpop.f32.mrf.mxu0
      %v217 = vadd.f32 %v154, %v216
      %v218 = vpop.f32.mrf.mxu0
      %v219 = vadd.f32 %v154, %v218
      %220 = vmatprep.mubr.f32.mxu0 0.0
      %221 = vmatmul.mubr.f32.gmra.mxu0 %v173
      %v222 = vpop.f32.mrf.mxu0
      %v223 = vadd.f32 %v159, %v222
      %v224 = vpop.f32.mrf.mxu0
      %v225 = vadd.f32 %v159, %v224
      %226 = vdwg.mxu0
      %v227 = vmax.f32 %v217, 0.0
      %v228 = vmax.f32 %v219, 0.0
      %v229 = vmax.f32 %v223, 0.0
      %v230 = vmax.f32 %v225, 0.0
      %v231 = vld [vmem:[%s1 + $0x10] sm:$0xff]
      %233 = vset.pattern.permute.xlu0 10
      %234 = vperm.xlu0 %233, %v231
      %v235 = vpop.permute.xlu0 %234
      %vm237 = vcmask 80896
      %v238 = vsel %vm237, %v231, 0
      %v241 = vsel %vm175, %v229, 0
      %v244 = vsel %vm175, %v230, 0
      %246 = vmatprep.subr.mxu0 0.0
      %247 = vmatpush1.msra.mxu0 0.0
      %248 = vmatprep.subr.mxu0 0.0
      %249 = vmatpush1.msra.mxu0 0.0
      %250 = vmatprep.subr.mxu0 0.0
      %251 = vmatpush1.msra.mxu0 0.0
      %252 = vmatprep.subr.mxu0 0.0
      %253 = vmatpush1.msra.mxu0 0.0
      %254 = vmatprep.subr.mxu0 0.0
      %255 = vmatpush1.msra.mxu0 0.0
      %256 = vmatprep.subr.mxu0 0.0
      %257 = vmatpush1.msra.mxu0 0.0
      %258 = vmatprep.subr.mxu0 0.0
      %259 = vmatpush1.msra.mxu0 0.0
      %260 = vmatprep.subr.mxu0 0.0
      %261 = vmatpush1.msra.mxu0 0.0
      %262 = vmatprep.subr.mxu0 0.0
      %263 = vmatpush1.msra.mxu0 0.0
      %264 = vmatprep.subr.mxu0 0.0
      %265 = vmatpush1.msra.mxu0 0.0
      %266 = vmatprep.subr.mxu0 0.0
      %267 = vmatpush1.msra.mxu0 0.0
      %268 = vmatprep.subr.mxu0 0.0
      %269 = vmatpush1.msra.mxu0 0.0
      %270 = vmatprep.subr.mxu0 0.0
      %271 = vmatpush1.msra.mxu0 0.0
      %272 = vmatprep.subr.mxu0 0.0
      %273 = vmatpush1.msra.mxu0 0.0
      %274 = vmatprep.subr.mxu0 %v244
      %275 = vmatpush1.msra.mxu0 %v241
      %276 = vmatprep.subr.mxu0 %v228
      %277 = vmatpush1.msra.mxu0 %v227
      %278 = vmatprep.subr.mxu0 0.0
      %279 = vmatpush2.msra.mxu0 0.0
      %280 = vmatprep.subr.mxu0 0.0
      %281 = vmatpush2.msra.mxu0 0.0
      %282 = vmatprep.subr.mxu0 0.0
      %283 = vmatpush2.msra.mxu0 0.0
      %284 = vmatprep.subr.mxu0 0.0
      %285 = vmatpush2.msra.mxu0 0.0
      %286 = vmatprep.subr.mxu0 0.0
      %287 = vmatpush2.msra.mxu0 0.0
      %288 = vmatprep.subr.mxu0 0.0
      %289 = vmatpush2.msra.mxu0 0.0
      %290 = vmatprep.subr.mxu0 0.0
      %291 = vmatpush2.msra.mxu0 0.0
      %292 = vmatprep.subr.mxu0 0.0
      %293 = vmatpush2.msra.mxu0 0.0
      %294 = vmatprep.subr.mxu0 0.0
      %295 = vmatpush2.msra.mxu0 0.0
      %296 = vmatprep.subr.mxu0 0.0
      %297 = vmatpush2.msra.mxu0 0.0
      %298 = vmatprep.subr.mxu0 0.0
      %299 = vmatpush2.msra.mxu0 0.0
      %300 = vmatprep.subr.mxu0 0.0
      %301 = vmatpush2.msra.mxu0 0.0
      %302 = vmatprep.subr.mxu0 0.0
      %303 = vmatpush2.msra.mxu0 0.0
      %304 = vmatprep.subr.mxu0 0.0
      %305 = vmatpush2.msra.mxu0 0.0
      %306 = vmatprep.subr.mxu0 0.0
      %307 = vmatpush2.msra.mxu0 0.0
      %308 = vmatprep.subr.mxu0 0.0
      %309 = vmatpush2.msra.mxu0 0.0
      %310 = vmatprep.mubr.f32.mxu0 0.0
      %311 = vmatmul.mubr.f32.gmra.mxu0 %v238
      %v312 = vpop.f32.mrf.mxu0
      %v313 = vadd.f32 %v235, %v312
      %v314 = vpop.f32.mrf.mxu0
      %v315 = vadd.f32 %v235, %v314
      %316 = vdwg.mxu0
      %v317 = vmax.f32 %v313, 0.0
      %v318 = vmax.f32 %v315, 0.0
      %v319 = vld [vmem:[%s1 + $0x18] sm:$0xff]
      %321 = vset.pattern.permute.xlu0 8
      %322 = vperm.xlu0 %321, %v319
      %v323 = vpop.permute.xlu0 %322
      %vm325 = vcmask 64512
      %v326 = vsel %vm325, %v319, 0
      %328 = vmatprep.subr.mxu0 0.0
      %329 = vmatpush1.msra.mxu0 0.0
      %330 = vmatprep.subr.mxu0 0.0
      %331 = vmatpush1.msra.mxu0 0.0
      %332 = vmatprep.subr.mxu0 0.0
      %333 = vmatpush1.msra.mxu0 0.0
      %334 = vmatprep.subr.mxu0 0.0
      %335 = vmatpush1.msra.mxu0 0.0
      %336 = vmatprep.subr.mxu0 0.0
      %337 = vmatpush1.msra.mxu0 0.0
      %338 = vmatprep.subr.mxu0 0.0
      %339 = vmatpush1.msra.mxu0 0.0
      %340 = vmatprep.subr.mxu0 0.0
      %341 = vmatpush1.msra.mxu0 0.0
      %342 = vmatprep.subr.mxu0 0.0
      %343 = vmatpush1.msra.mxu0 0.0
      %344 = vmatprep.subr.mxu0 0.0
      %345 = vmatpush1.msra.mxu0 0.0
      %346 = vmatprep.subr.mxu0 0.0
      %347 = vmatpush1.msra.mxu0 0.0
      %348 = vmatprep.subr.mxu0 0.0
      %349 = vmatpush1.msra.mxu0 0.0
      %350 = vmatprep.subr.mxu0 0.0
      %351 = vmatpush1.msra.mxu0 0.0
      %352 = vmatprep.subr.mxu0 0.0
      %353 = vmatpush1.msra.mxu0 0.0
      %354 = vmatprep.subr.mxu0 0.0
      %355 = vmatpush1.msra.mxu0 0.0
      %356 = vmatprep.subr.mxu0 0.0
      %357 = vmatpush1.msra.mxu0 0.0
      %358 = vmatprep.subr.mxu0 %v318
      %359 = vmatpush1.msra.mxu0 %v317
      %360 = vmatprep.subr.mxu0 0.0
      %361 = vmatpush2.msra.mxu0 0.0
      %362 = vmatprep.subr.mxu0 0.0
      %363 = vmatpush2.msra.mxu0 0.0
      %364 = vmatprep.subr.mxu0 0.0
      %365 = vmatpush2.msra.mxu0 0.0
      %366 = vmatprep.subr.mxu0 0.0
      %367 = vmatpush2.msra.mxu0 0.0
      %368 = vmatprep.subr.mxu0 0.0
      %369 = vmatpush2.msra.mxu0 0.0
      %370 = vmatprep.subr.mxu0 0.0
      %371 = vmatpush2.msra.mxu0 0.0
      %372 = vmatprep.subr.mxu0 0.0
      %373 = vmatpush2.msra.mxu0 0.0
      %374 = vmatprep.subr.mxu0 0.0
      %375 = vmatpush2.msra.mxu0 0.0
      %376 = vmatprep.subr.mxu0 0.0
      %377 = vmatpush2.msra.mxu0 0.0
      %378 = vmatprep.subr.mxu0 0.0
      %379 = vmatpush2.msra.mxu0 0.0
      %380 = vmatprep.subr.mxu0 0.0
      %381 = vmatpush2.msra.mxu0 0.0
      %382 = vmatprep.subr.mxu0 0.0
      %383 = vmatpush2.msra.mxu0 0.0
      %384 = vmatprep.subr.mxu0 0.0
      %385 = vmatpush2.msra.mxu0 0.0
      %386 = vmatprep.subr.mxu0 0.0
      %387 = vmatpush2.msra.mxu0 0.0
      %388 = vmatprep.subr.mxu0 0.0
      %389 = vmatpush2.msra.mxu0 0.0
      %390 = vmatprep.subr.mxu0 0.0
      %391 = vmatpush2.msra.mxu0 0.0
      %392 = vmatprep.mubr.f32.mxu0 0.0
      %393 = vmatmul.mubr.f32.gmra.mxu0 %v326
      %v394 = vpop.f32.mrf.mxu0
      %v395 = vadd.f32 %v323, %v394
      %v396 = vpop.f32.mrf.mxu0
      %v397 = vadd.f32 %v323, %v396
      %398 = vdwg.mxu0
      %v401 = vrot.slane %v395, 1
      %v402 = vrot.slane %v397, 1
      %v405 = vmax.f32 %v395, %v401
      %v406 = vmax.f32 %v397, %v402
      %v407 = vrot.slane %v395, 2
      %v408 = vrot.slane %v397, 2
      %v411 = vmax.f32 %v405, %v407
      %v412 = vmax.f32 %v406, %v408
      %v413 = vlaneseq
      %v414 = vshrl.u32 %v413, 7
      %v415 = vsub.s32 0, %v414
      %v416 = vrot.slane %v411, %v415
      %v417 = vlaneseq
      %v418 = vshrl.u32 %v417, 7
      %v419 = vsub.s32 0, %v418
      %v420 = vrot.slane %v412, %v419
      %v421 = vsub.f32 %v395, %v416
      %v422 = vsub.f32 %v397, %v420
      %v423 = vmul.f32 %v421, 1.442695
      %v424 = vpow.pop %v423
      %v425 = vmul.f32 %v422, 1.442695
      %v426 = vpow.pop %v425
      %v429 = vrot.slane %v424, 1
      %v430 = vrot.slane %v426, 1
      %v433 = vadd.f32 %v424, %v429
      %v434 = vadd.f32 %v426, %v430
      %v435 = vrot.slane %v424, 2
      %v436 = vrot.slane %v426, 2
      %v439 = vadd.f32 %v433, %v435
      %v440 = vadd.f32 %v434, %v436
      %v441 = vrcp.pop %v439
      %v442 = vrcp.pop %v440
      %v443 = vlaneseq
      %v444 = vshrl.u32 %v443, 7
      %v445 = vsub.s32 0, %v444
      %v446 = vrot.slane %v441, %v445
      %v447 = vlaneseq
      %v448 = vshrl.u32 %v447, 7
      %v449 = vsub.s32 0, %v448
      %v450 = vrot.slane %v442, %v449
      %v451 = vmul.f32 %v424, %v446
      %v452 = vmul.f32 %v426, %v450
      %453 = vst [vmem:[%s145] sm:$0xff] %v451
      %454 = vst [vmem:[%s145 + $0x8] sm:$0xff] %v452
      %s455 = smul.u32 2, %s13
      %p456 = scmp.lt.s32.totalorder %s455, 3
      %s457 = scalar_select %p456, %s455, 3
      %s458 = smul.addr %s457, 8
      %s459 = scalar_lea.vmem %s2, %s458
      // Predicated region
      $region29: #{penguin_model_forward.1} parent=27 // pred_check
        %p460 = pneg %p78
      $region30: #{penguin_model_forward.1} parent=27 // pred_check_branch
        %462 = sbr.rel (%p460) target = $region32
      $region31: #{penguin_model_forward.1} parent=27 // pred_region
        %s463 = smul.u32 2, %s13
      $region32: #{penguin_model_forward.1} parent=27 // pred_fallthru
        _
    $region28: #{penguin_model_forward.1} parent=5 // pred_fallthru
      _
    %p464 = scmp.le.s32.totalorder 2, %s8
    // Predicated region
    $region33: #{penguin_model_forward.1} parent=5 // pred_check
      %p465 = pneg %p464
    $region34: #{penguin_model_forward.1} parent=5 // pred_check_branch
      %467 = sbr.rel (%p465) target = $region36
    $region35: #{penguin_model_forward.1} parent=5 // pred_region
      %s468 = ssub.s32 %s8, 2
      // Predicated region
      $region37: #{penguin_model_forward.1} parent=35 // pred_check
        %p469 = pneg %p84
      $region38: #{penguin_model_forward.1} parent=35 // pred_check_branch
        %471 = sbr.rel (%p469) target = $region40
      $region39: #{penguin_model_forward.1} parent=35 // pred_region
        %s472 = smul.u32 2, %s14
        %p473 = scmp.lt.s32.totalorder %s472, 3
        %s474 = scalar_select %p473, %s472, 3
        %s475 = smul.addr %s474, 8
        %s476 = scalar_lea.vmem %s2, %s475
      $region40: #{penguin_model_forward.1} parent=35 // pred_fallthru
        _
    $region36: #{penguin_model_forward.1} parent=5 // pred_fallthru
      _
  $region6: #{penguin_model_forward.1} parent=0 // loop_footer
    %s12 = sadd.s32 1, %s8
  $region7: #{penguin_model_forward.1} parent=0 // loop_footer_branch
    %7 = sbr.rel target = $region3
  $region8: #{penguin_model_forward.1} parent=0 // loop_exit
    _

</llo_original>
